<compile_context>
chip_gen: v7x
topology: tpu7x:2x2x1
jax: 0.10.0
libtpu: 0.0.40
codegen_flags: <defaults>
</compile_context>

<pallas_src>
import jax
import jax.numpy as jnp
from jax.experimental import pallas as pl
from jax.experimental.pallas import tpu as pltpu


def _affine_kernel(w_ref, b_ref, x_ref, o_ref):
    # o (7, TILE) = W_eff^T (7,5) @ x^T (5, TILE) + b (7,1)
    o_ref[...] = (
        jnp.dot(w_ref[...], x_ref[...], preferred_element_type=jnp.float32)
        + b_ref[...]
    ).astype(o_ref.dtype)


def _round_up(x, m):
    return (x + m - 1) // m * m


def net_forward(x, params, *, tile_n=4096):
    """Inference forward of Net.  x: (N, 5) float32 -> (N, 7) float32."""
    n = x.shape[0]
    eps = 1e-5

    # ---- Wrapper-side algebra (constant-sized, fused/const-folded by XLA) ----
    # BatchNorm1d(5), eval mode: y = x * scale + shift.
    scale = params["bn_gamma"] / jnp.sqrt(params["bn_var"] + eps)      # (5,)
    shift = params["bn_beta"] - params["bn_mean"] * scale              # (5,)

    # PyTorch Linear stores weight as (out, in); transpose to (in, out).
    w1 = params["fc1_w"].T; w2 = params["fc2_w"].T
    w3 = params["fc3_w"].T; w4 = params["fc4_w"].T
    b1 = params["fc1_b"];   b2 = params["fc2_b"]
    b3 = params["fc3_b"];   b4 = params["fc4_b"]

    # Fold BN into fc1, then collapse the activation-free chain into one affine.
    # Dropout(0.2) is identity at inference.
    # TODO(synk): training-mode dropout / batch-stats BN not emitted (inference only).
    w1f = scale[:, None] * w1                         # (5, 16)
    b1f = shift @ w1 + b1                             # (16,)
    w_eff = w1f @ w2 @ w3 @ w4                        # (5, 7)
    b_eff = ((b1f @ w2 + b2) @ w3 + b3) @ w4 + b4     # (7,)

    # ---- Lane-dense layout: batch on the lane (last) dimension ----------------
    wt = w_eff.T.astype(jnp.float32)                  # (7, 5)
    bcol = b_eff.reshape(7, 1).astype(jnp.float32)    # (7, 1)
    xt = x.astype(jnp.float32).T                      # (5, N)

    n_pad = _round_up(max(n, 1), 128)                 # lane-aligned batch
    tile = min(tile_n, n_pad)
    n_pad = _round_up(n_pad, tile)
    xt = jnp.pad(xt, ((0, 0), (0, n_pad - n)))        # (5, n_pad)

    grid = (n_pad // tile,)

    out_t = pl.pallas_call(
        _affine_kernel,
        out_shape=jax.ShapeDtypeStruct((7, n_pad), jnp.float32),
        grid=grid,
        in_specs=[
            pl.BlockSpec((7, 5), lambda i: (0, 0)),     # W_eff^T  (VMEM-resident)
            pl.BlockSpec((7, 1), lambda i: (0, 0)),     # b_eff
            pl.BlockSpec((5, tile), lambda i: (0, i)),  # x^T batch tile (lane-dense)
        ],
        out_specs=pl.BlockSpec((7, tile), lambda i: (0, i)),
        compiler_params=pltpu.CompilerParams(
            dimension_semantics=("parallel",),          # shard batch tiles across TCs
        ),
    )(wt, bcol, xt)

    return out_t[:, :n].T                               # (N, 7)


def init_params(key):
    ks = jax.random.split(key, 12)
    p = {}
    # BatchNorm1d(5): deterministic but non-trivial stats/affine.
    p["bn_gamma"] = jax.random.uniform(ks[0], (5,), jnp.float32, 0.5, 1.5)
    p["bn_beta"]  = jax.random.normal(ks[1], (5,), jnp.float32) * 0.1
    p["bn_mean"]  = jax.random.normal(ks[2], (5,), jnp.float32) * 0.1
    p["bn_var"]   = jax.random.uniform(ks[3], (5,), jnp.float32, 0.5, 1.5)

    # Linear layers (PyTorch convention: weight (out, in), bias (out,)).
    def lin(kw, kb, out_f, in_f):
        bound = 1.0 / jnp.sqrt(in_f)
        w = jax.random.uniform(kw, (out_f, in_f), jnp.float32, -bound, bound)
        b = jax.random.uniform(kb, (out_f,), jnp.float32, -bound, bound)
        return w, b

    p["fc1_w"], p["fc1_b"] = lin(ks[4],  ks[5],  16, 5)
    p["fc2_w"], p["fc2_b"] = lin(ks[6],  ks[7],  64, 16)
    p["fc3_w"], p["fc3_b"] = lin(ks[8],  ks[9],  16, 64)
    p["fc4_w"], p["fc4_b"] = lin(ks[10], ks[11], 7, 16)
    return p


def reference_forward(x, params):
    # Faithful layered reference (eval-mode BN, identity dropout).
    eps = 1e-5
    scale = params["bn_gamma"] / jnp.sqrt(params["bn_var"] + eps)
    shift = params["bn_beta"] - params["bn_mean"] * scale
    h = x * scale + shift
    h = h @ params["fc1_w"].T + params["fc1_b"]
    h = h @ params["fc2_w"].T + params["fc2_b"]
    h = h @ params["fc3_w"].T + params["fc3_b"]
    h = h @ params["fc4_w"].T + params["fc4_b"]
    return h


if __name__ == "__main__":
    key = jax.random.PRNGKey(0)
    kx, kp = jax.random.split(key)
    x = jax.random.normal(kx, (8, 5), jnp.float32)      # batch=8, features=5
    params = init_params(kp)

    out = net_forward(x, params)
    out = jax.block_until_ready(out)

    ref = reference_forward(x, params)
    assert out.shape == (8, 7), out.shape
    assert jnp.allclose(out, ref, atol=1e-4, rtol=1e-3), \
        f"max abs err {jnp.max(jnp.abs(out - ref))}"
    print("KERNEL_OK")
</pallas_src>

<mosaic_0001>
module attributes {stable_mosaic.version = 11 : i64} {
  func.func @_affine_kernel(%arg0: i32, %arg1: memref<7x5xf32, #tpu.memory_space<vmem>>, %arg2: memref<7x1xf32, #tpu.memory_space<vmem>>, %arg3: memref<5x128xf32, #tpu.memory_space<vmem>>, %arg4: memref<7x128xf32, #tpu.memory_space<vmem>>) attributes {dimension_semantics = [#tpu.dimension_semantics<parallel>], iteration_bounds = array<i64: 1>, scalar_prefetch = 0 : i64, scratch_operands = 0 : i64, tpu.core_type = #tpu.core_type<tc>, window_params = [{pipeline_mode = #tpu.pipeline_mode<synchronous>, transform_indices = @transform_0, window_bounds = array<i64: 7, 5>}, {pipeline_mode = #tpu.pipeline_mode<synchronous>, transform_indices = @transform_1, window_bounds = array<i64: 7, 1>}, {transform_indices = @transform_2, window_bounds = array<i64: 5, 128>}, {transform_indices = @transform_3, window_bounds = array<i64: 7, 128>}]} {
    %c0 = arith.constant 0 : index
    %c0_0 = arith.constant 0 : index
    %0 = vector.load %arg1[%c0, %c0_0] : memref<7x5xf32, #tpu.memory_space<vmem>>, vector<7x5xf32>
    %c0_1 = arith.constant 0 : index
    %c0_2 = arith.constant 0 : index
    %1 = vector.load %arg3[%c0_1, %c0_2] : memref<5x128xf32, #tpu.memory_space<vmem>>, vector<5x128xf32>
    %cst = arith.constant dense<0.000000e+00> : vector<7x128xf32>
    %2 = tpu.matmul %0, %1, %cst {dimension_numbers = #tpu.dot_dimension_numbers<[1], [0], [0], [1], [0, 0, 1, 1], [], []>} : vector<7x5xf32>, vector<5x128xf32>, vector<7x128xf32> -> vector<7x128xf32>
    %c0_3 = arith.constant 0 : index
    %c0_4 = arith.constant 0 : index
    %3 = vector.load %arg2[%c0_3, %c0_4] : memref<7x1xf32, #tpu.memory_space<vmem>>, vector<7x1xf32>
    %4 = vector.broadcast %3 : vector<7x1xf32> to vector<7x128xf32>
    %5 = arith.addf %2, %4 : vector<7x128xf32>
    %c0_5 = arith.constant 0 : index
    %c0_6 = arith.constant 0 : index
    %6 = vector.load %arg4[%c0_5, %c0_6] : memref<7x128xf32, #tpu.memory_space<vmem>>, vector<7x128xf32>
    tpu.vector_store %arg4[%c0_5, %c0_6], %5 {strides = array<i32>} : memref<7x128xf32, #tpu.memory_space<vmem>>, vector<7x128xf32>,
    return
  }
  func.func @transform_0(%arg0: i32) -> (i32, i32) {
    %c0_i32 = arith.constant 0 : i32
    %c0_i32_0 = arith.constant 0 : i32
    %c0_i32_1 = arith.constant 0 : i32
    return %c0_i32, %c0_i32_0 : i32, i32
  }
  func.func @transform_1(%arg0: i32) -> (i32, i32) {
    %c0_i32 = arith.constant 0 : i32
    %c0_i32_0 = arith.constant 0 : i32
    %c0_i32_1 = arith.constant 0 : i32
    return %c0_i32, %c0_i32_0 : i32, i32
  }
  func.func @transform_2(%arg0: i32) -> (i32, i32) {
    %c0_i32 = arith.constant 0 : i32
    %c0_i32_0 = arith.constant 0 : i32
    return %c0_i32, %arg0 : i32, i32
  }
  func.func @transform_3(%arg0: i32) -> (i32, i32) {
    %c0_i32 = arith.constant 0 : i32
    %c0_i32_0 = arith.constant 0 : i32
    return %c0_i32, %arg0 : i32, i32
  }
}

</mosaic_0001>

<llo_original>
// kernel: tpu_custom_call.1
$region0: #{tpu_custom_call.1}
  #allocation0 [shape = 'u32[]', space=smem, size = 0x4, offset = 0x4, fixed_abs, tag = 'smem constant byte address 0x4 - core index']
  #allocation1 [shape = 'u32[144,128]{1,0:T(1,128)}', space=vmem, size = 0x12000, scoped, tag = 'internal scratch']
  %s0 = inlined_call_operand.vmem [shape: f32[7,5], index: 0, kind: input, shape index: {}]
  %s1 = inlined_call_operand.vmem [shape: f32[7,1], index: 1, kind: input, shape index: {}]
  %s2 = inlined_call_operand.vmem [shape: f32[5,128], index: 2, kind: input, shape index: {}]
  %s3 = inlined_call_operand.hbm [shape: f32[7,128], index: 3, kind: output, shape index: {}]
  %s4 = sld [smem:[#allocation0]]
  $region22: #{tpu_custom_call.1} parent=0
    _
  %s6 = ssub.s32 1, %s4
  %s7 = scalar_select 0, %s6, %s4
  $region1: #{tpu_custom_call.1} parent=0
    #allocation2 [shape = 'u8[4096]{0}', space=vmem, size = 0x1000, scoped, tag = 'output window, operand 0, single buffered']
    #allocation3 [shape = 's32[1]{0}', space=sflag, size = 0x4, scoped, tag = 'scoped memory for tpu_custom_call.1']
    %8 = vsyncpa [#allocation3], 0
    // Predicated region
    $region2: #{tpu_custom_call.1} parent=1 // pred_check
      _
    $region3: #{tpu_custom_call.1} parent=1 // pred_check_branch
      %10 = sbr.rel (0) target = $region5
    $region4: #{tpu_custom_call.1} parent=1 // pred_region
      _
    $region5: #{tpu_custom_call.1} parent=1 // pred_fallthru
      _
    // Predicated region
    $region6: #{tpu_custom_call.1} parent=1 // pred_check
      _
    $region7: #{tpu_custom_call.1} parent=1 // pred_check_branch
      %12 = sbr.rel (0) target = $region9
    $region8: #{tpu_custom_call.1} parent=1 // pred_region
      _
    $region9: #{tpu_custom_call.1} parent=1 // pred_fallthru
      _
    // Predicated region
    $region10: #{tpu_custom_call.1} parent=1 // pred_check
      _
    $region11: #{tpu_custom_call.1} parent=1 // pred_check_branch
      %14 = sbr.rel (0) target = $region13
    $region12: #{tpu_custom_call.1} parent=1 // pred_region
      _
    $region13: #{tpu_custom_call.1} parent=1 // pred_fallthru
      _
    %v15 = vld [vmem:[%s0] sm:$0x7f]
    %v16 = vld [vmem:[%s2] sm:$0x1f]
    %v17 = vld [vmem:[%s1] sm:$0x7f]
    %19 = vset.pattern.permute.xlu0 0
    %20 = vperm.xlu0 %19, %v17
    %v21 = vpop.permute.xlu0 %20
    %vm23 = vcmask 39936
    %v25 = vsel %vm23, %v15, 0
    %vm27 = vcmask 1044480
    %v29 = vsel %vm27, %v16, 0
    %31 = vmatprep.subr.mxu0 0.0
    %32 = vmatpush1.msra.mxu0 %v29
    %33 = vmatprep.subr.mxu0 0.0
    %34 = vmatpush1.msra.mxu0 0.0
    %35 = vmatprep.subr.mxu0 0.0
    %36 = vmatpush1.msra.mxu0 0.0
    %37 = vmatprep.subr.mxu0 0.0
    %38 = vmatpush1.msra.mxu0 0.0
    %39 = vmatprep.subr.mxu0 0.0
    %40 = vmatpush1.msra.mxu0 0.0
    %41 = vmatprep.subr.mxu0 0.0
    %42 = vmatpush1.msra.mxu0 0.0
    %43 = vmatprep.subr.mxu0 0.0
    %44 = vmatpush1.msra.mxu0 0.0
    %45 = vmatprep.subr.mxu0 0.0
    %46 = vmatpush1.msra.mxu0 0.0
    %47 = vmatprep.subr.mxu0 0.0
    %48 = vmatpush1.msra.mxu0 0.0
    %49 = vmatprep.subr.mxu0 0.0
    %50 = vmatpush1.msra.mxu0 0.0
    %51 = vmatprep.subr.mxu0 0.0
    %52 = vmatpush1.msra.mxu0 0.0
    %53 = vmatprep.subr.mxu0 0.0
    %54 = vmatpush1.msra.mxu0 0.0
    %55 = vmatprep.subr.mxu0 0.0
    %56 = vmatpush1.msra.mxu0 0.0
    %57 = vmatprep.subr.mxu0 0.0
    %58 = vmatpush1.msra.mxu0 0.0
    %59 = vmatprep.subr.mxu0 0.0
    %60 = vmatpush1.msra.mxu0 0.0
    %61 = vmatprep.subr.mxu0 0.0
    %62 = vmatpush1.msra.mxu0 0.0
    %63 = vmatprep.subr.mxu0 0.0
    %64 = vmatpush1.msra.mxu0 0.0
    %65 = vmatprep.subr.mxu0 0.0
    %66 = vmatpush1.msra.mxu0 0.0
    %67 = vmatprep.subr.mxu0 0.0
    %68 = vmatpush1.msra.mxu0 0.0
    %69 = vmatprep.subr.mxu0 0.0
    %70 = vmatpush1.msra.mxu0 0.0
    %71 = vmatprep.subr.mxu0 0.0
    %72 = vmatpush1.msra.mxu0 0.0
    %73 = vmatprep.subr.mxu0 0.0
    %74 = vmatpush1.msra.mxu0 0.0
    %75 = vmatprep.subr.mxu0 0.0
    %76 = vmatpush1.msra.mxu0 0.0
    %77 = vmatprep.subr.mxu0 0.0
    %78 = vmatpush1.msra.mxu0 0.0
    %79 = vmatprep.subr.mxu0 0.0
    %80 = vmatpush1.msra.mxu0 0.0
    %81 = vmatprep.subr.mxu0 0.0
    %82 = vmatpush1.msra.mxu0 0.0
    %83 = vmatprep.subr.mxu0 0.0
    %84 = vmatpush1.msra.mxu0 0.0
    %85 = vmatprep.subr.mxu0 0.0
    %86 = vmatpush1.msra.mxu0 0.0
    %87 = vmatprep.subr.mxu0 0.0
    %88 = vmatpush1.msra.mxu0 0.0
    %89 = vmatprep.subr.mxu0 0.0
    %90 = vmatpush1.msra.mxu0 0.0
    %91 = vmatprep.subr.mxu0 0.0
    %92 = vmatpush1.msra.mxu0 0.0
    %93 = vmatprep.subr.mxu0 0.0
    %94 = vmatpush1.msra.mxu0 0.0
    %95 = vmatprep.mubr.f32.mxu0 0.0
    %96 = vmatmul.mubr.f32.gmra.mrb[0].mxu0 %v25
    %v97 = vpop.f32.mrb[0].mxu0
    %v98 = vadd.f32 %v21, %v97
    %v99 = vpop.f32.mrb[0].mxu0
    %100 = vdwg.mxu0
    %101 = vst [vmem:[#allocation2] sm:$0x7f] %v98
    // Predicated region
    $region14: #{tpu_custom_call.1} parent=1 // pred_check
      _
    $region15: #{tpu_custom_call.1} parent=1 // pred_check_branch
      %103 = sbr.rel (0) target = $region17
    $region16: #{tpu_custom_call.1} parent=1 // pred_region
      %s105 = ssub.s32 128, 128
      %106 = vsyncadd [#allocation3], %s105
      %s108 = sshll.u32 [#allocation2], 4
      %s109 = int_to_ptr.vmem [resolvable:$true] %s108
      %111 = dma.vmem_to_hbm [thread:$0]  %s109, 128, %s3, [#allocation3]
    $region17: #{tpu_custom_call.1} parent=1 // pred_fallthru
      _
    // Predicated region
    $region18: #{tpu_custom_call.1} parent=1 // pred_check
      _
    $region19: #{tpu_custom_call.1} parent=1 // pred_check_branch
      %113 = sbr.rel (0) target = $region21
    $region20: #{tpu_custom_call.1} parent=1 // pred_region
      %114 = dma.done [#allocation3], 128
    $region21: #{tpu_custom_call.1} parent=1 // pred_fallthru
      _
    %115 = vsyncpa [#allocation3], 1

</llo_original>
